<compile_context>
chip_gen: v7x
topology: tpu7x:2x2x1
jax: 0.10.0
libtpu: 0.0.40
codegen_flags: <defaults>
</compile_context>

<pallas_src>
import functools
import math

import jax
import jax.numpy as jnp
from jax.experimental import pallas as pl
from jax.experimental.pallas import tpu as pltpu


# Matmul-input dtype. Keep f32 so the tight f32 reference check passes; on
# v6e/v7x flip to jnp.bfloat16 (accumulation stays f32 via
# preferred_element_type, softmax stays f32).
MXU_INPUT_DTYPE = jnp.float32

_VMEM_LIMIT = 48 * 1024 * 1024  # fits under v7x's 64 MiB physical VMEM


# ----------------------------- Fused kernel -------------------------------

def _fused_mha_kernel(xq_ref, xk_ref, xv_ref, sph_ref,
                      w_qkv_ref, b_qkv_ref, w_o_ref, b_o_ref,
                      o_ref, acc_ref, *, d_k):
    """One (batch, head) step: project -> attend -> accumulate out-proj.

    xq/xk/xv : (1, N, D)          sph : (1, 1, N, N)
    w_qkv    : (1, D, 3*d_k)      b_qkv : (1, 1, 3*d_k)   (per-head, scale folded)
    w_o      : (1, d_k, D)        b_o   : (1, D)
    o        : (1, N, D)  resident across the head ('arbitrary') axis
    acc      : (N, D) f32 VMEM scratch accumulator
    """
    h = pl.program_id(1)
    w = w_qkv_ref[0]          # (D, 3*d_k)
    bias = b_qkv_ref[0]       # (1, 3*d_k)

    def proj(x_ref, lo, hi):
        return (jnp.dot(x_ref[0].astype(MXU_INPUT_DTYPE),
                        w[:, lo:hi].astype(MXU_INPUT_DTYPE),
                        preferred_element_type=jnp.float32)
                + bias[:, lo:hi])

    q = proj(xq_ref, 0, d_k)             # (N, d_k); 1/sqrt(d_k) folded in
    k = proj(xk_ref, d_k, 2 * d_k)       # (N, d_k)
    v = proj(xv_ref, 2 * d_k, 3 * d_k)   # (N, d_k)

    # scores = q @ k^T : contract last dims directly (no k.T / XLU transpose).
    scores = jax.lax.dot_general(
        q.astype(MXU_INPUT_DTYPE), k.astype(MXU_INPUT_DTYPE),
        (((1,), (1,)), ((), ())),
        preferred_element_type=jnp.float32)
    scores = scores * sph_ref[0, 0]

    # Numerically-stable softmax over the last axis, in f32.
    m = jnp.max(scores, axis=-1, keepdims=True)
    e = jnp.exp(scores - m)
    denom = jnp.sum(e, axis=-1, keepdims=True)
    p = e * pl.reciprocal(denom, approx=True)   # divide on the EUP slot

    # Dropout is identity in eval mode.
    attn = jnp.dot(p.astype(MXU_INPUT_DTYPE), v.astype(MXU_INPUT_DTYPE),
                   preferred_element_type=jnp.float32)           # (N, d_k)

    # Per-head slice of the output projection; sum over heads == concat+Linear.
    contrib = jnp.dot(attn.astype(MXU_INPUT_DTYPE),
                      w_o_ref[0].astype(MXU_INPUT_DTYPE),
                      preferred_element_type=jnp.float32)         # (N, D)

    @pl.when(h == 0)
    def _():
        acc_ref[...] = contrib + b_o_ref[...]

    @pl.when(h > 0)
    def _():
        acc_ref[...] = acc_ref[...] + contrib

    @pl.when(h == pl.num_programs(1) - 1)
    def _():
        o_ref[0] = acc_ref[...].astype(o_ref.dtype)   # single lane-dense store


# ----------------------------- pallas_call wrapper ------------------------

def fused_multihead_attention(query, key, value, sph,
                              w_qkv, b_qkv, w_o, b_o, heads):
    """query/key/value: (B, N, D); sph: (B|1, H|1, N, N) -> (B, N, D)."""
    B, N, D = query.shape
    d_k = D // heads
    H = heads
    assert sph.ndim == 4 and sph.shape[-2:] == (N, N)

    x_spec = pl.BlockSpec((1, N, D), lambda b, h: (b, 0, 0))

    b_bcast = sph.shape[0] == 1
    h_bcast = sph.shape[1] == 1
    sph_spec = pl.BlockSpec(
        (1, 1, N, N),
        lambda b, h, _bb=b_bcast, _hb=h_bcast: (0 if _bb else b,
                                                0 if _hb else h, 0, 0))

    w_qkv_spec = pl.BlockSpec((1, D, 3 * d_k), lambda b, h: (h, 0, 0))
    b_qkv_spec = pl.BlockSpec((1, 1, 3 * d_k), lambda b, h: (h, 0, 0))
    w_o_spec = pl.BlockSpec((1, d_k, D), lambda b, h: (h, 0, 0))
    b_o_spec = pl.BlockSpec((1, D), lambda b, h: (0, 0))
    o_spec = pl.BlockSpec((1, N, D), lambda b, h: (b, 0, 0))

    cost = pl.CostEstimate(
        flops=B * H * (8 * N * D * d_k + 4 * N * N * d_k + 6 * N * N),
        transcendentals=B * H * N * N,
        bytes_accessed=4 * (4 * B * N * D
                            + sph.shape[0] * sph.shape[1] * N * N
                            + 4 * D * D))

    return pl.pallas_call(
        functools.partial(_fused_mha_kernel, d_k=d_k),
        grid=(B, H),
        in_specs=[x_spec, x_spec, x_spec, sph_spec,
                  w_qkv_spec, b_qkv_spec, w_o_spec, b_o_spec],
        out_specs=o_spec,
        out_shape=jax.ShapeDtypeStruct((B, N, D), query.dtype),
        scratch_shapes=[pltpu.VMEM((N, D), jnp.float32)],
        compiler_params=pltpu.CompilerParams(
            dimension_semantics=("parallel", "arbitrary"),
            vmem_limit_bytes=_VMEM_LIMIT),
        cost_estimate=cost,
    )(query, key, value, sph, w_qkv, b_qkv, w_o, b_o)


# ----------------------------- Module wrapper -----------------------------

def init_multihead_attention_params(key, heads, dim_model):
    """PyTorch-style Linear init: U(-1/sqrt(fan_in), 1/sqrt(fan_in))."""
    assert dim_model % heads == 0
    params = []
    bound = 1.0 / math.sqrt(dim_model)
    for _ in range(4):
        kw, kb, key = jax.random.split(key, 3)
        w = jax.random.uniform(
            kw, (dim_model, dim_model), jnp.float32, -bound, bound
        )  # PyTorch weight layout (out, in)
        b = jax.random.uniform(kb, (dim_model,), jnp.float32, -bound, bound)
        params.append((w, b))
    return params


def prepare_params(params, heads):
    """One-time rearrangement of PyTorch-layout weights for the kernel.

    - per-head, pre-transposed QKV weight  (H, D, 3*d_k)
    - per-head QKV bias                    (H, 1, 3*d_k)
    - per-head output weight               (H, d_k, D)
    - output bias                          (1, D)
    The 1/sqrt(d_k) attention scale is folded into Wq / bq.
    """
    (wq, bq), (wk, bk), (wv, bv), (wo, bo) = params
    D = wq.shape[0]
    d_k = D // heads
    scale = 1.0 / math.sqrt(d_k)

    def split_heads_t(w):  # (D_out, D_in) -> (H, D_in, d_k)
        return jnp.transpose(w.reshape(heads, d_k, D), (0, 2, 1))

    w_qkv = jnp.concatenate(
        [split_heads_t(wq) * scale, split_heads_t(wk), split_heads_t(wv)],
        axis=-1)
    b_qkv = jnp.concatenate(
        [bq.reshape(heads, d_k) * scale,
         bk.reshape(heads, d_k),
         bv.reshape(heads, d_k)], axis=-1).reshape(heads, 1, 3 * d_k)
    w_o = jnp.transpose(wo.reshape(D, heads, d_k), (1, 2, 0))  # (H, d_k, D)
    b_o = bo.reshape(1, D)
    return {"w_qkv": w_qkv, "b_qkv": b_qkv, "w_o": w_o, "b_o": b_o}


@functools.partial(jax.jit, static_argnames=("heads",))
def multihead_attention_forward(prepped, query, key, value, sph, heads):
    """Forward pass of gradformer MultiheadAttention (mask=None, eval mode)."""
    sph = sph.astype(jnp.float32)
    return fused_multihead_attention(
        query, key, value, sph,
        prepped["w_qkv"], prepped["b_qkv"], prepped["w_o"], prepped["b_o"],
        heads)


# ------------------------------- Reference --------------------------------

def reference_forward(params, query, key, value, sph, heads):
    B, N, D = query.shape
    d_k = D // heads
    (wq, bq), (wk, bk), (wv, bv), (wo, bo) = params

    def proj(x, w, b):
        y = x @ w.T + b
        return y.reshape(B, N, heads, d_k).transpose(0, 2, 1, 3)

    q, k, v = proj(query, wq, bq), proj(key, wk, bk), proj(value, wv, bv)
    scores = jnp.einsum("bhqd,bhkd->bhqk", q, k) / math.sqrt(d_k)
    scores = scores * jnp.broadcast_to(sph, scores.shape)
    p = jax.nn.softmax(scores, axis=-1)
    x = jnp.einsum("bhqk,bhkd->bhqd", p, v)
    x = x.transpose(0, 2, 1, 3).reshape(B, N, D)
    return x @ wo.T + bo


# --------------------------------- Main ------------------------------------

if __name__ == "__main__":
    B, N, heads, dim_model = 2, 8, 4, 32

    root = jax.random.PRNGKey(0)
    k_par, k_q, k_k, k_v, k_s = jax.random.split(root, 5)

    params = init_multihead_attention_params(k_par, heads, dim_model)
    prepped = prepare_params(params, heads)

    query = jax.random.normal(k_q, (B, N, dim_model), jnp.float32)
    key_in = jax.random.normal(k_k, (B, N, dim_model), jnp.float32)
    value = jax.random.normal(k_v, (B, N, dim_model), jnp.float32)
    # sph: spatial-decay weights in (0, 1], shape (B, 1, N, N) (per-graph,
    # shared across heads) -- never broadcast to (B, H, N, N) in HBM.
    sph = jnp.exp(-jax.random.uniform(k_s, (B, 1, N, N), jnp.float32, 0.0, 3.0))

    out = multihead_attention_forward(prepped, query, key_in, value, sph, heads)
    out = jax.block_until_ready(out)

    ref = reference_forward(params, query, key_in, value, sph, heads)
    assert out.shape == (B, N, dim_model)
    max_err = float(jnp.max(jnp.abs(out - ref)))
    assert jnp.allclose(out, ref, atol=2e-3, rtol=2e-3), f"mismatch: {max_err}"

    print("KERNEL_OK")
</pallas_src>

<mosaic_0001>
module attributes {stable_mosaic.version = 11 : i64} {
  func.func @_fused_mha_kernel(%arg0: i32, %arg1: i32, %arg2: memref<1x8x32xf32, #tpu.memory_space<vmem>>, %arg3: memref<1x8x32xf32, #tpu.memory_space<vmem>>, %arg4: memref<1x8x32xf32, #tpu.memory_space<vmem>>, %arg5: memref<1x1x8x8xf32, #tpu.memory_space<vmem>>, %arg6: memref<1x32x24xf32, #tpu.memory_space<vmem>>, %arg7: memref<1x1x24xf32, #tpu.memory_space<vmem>>, %arg8: memref<1x8x32xf32, #tpu.memory_space<vmem>>, %arg9: memref<1x32xf32, #tpu.memory_space<vmem>>, %arg10: memref<1x8x32xf32, #tpu.memory_space<vmem>>, %arg11: memref<8x32xf32, #tpu.memory_space<vmem>>) attributes {dimension_semantics = [#tpu.dimension_semantics<parallel>, #tpu.dimension_semantics<arbitrary>], iteration_bounds = array<i64: 2, 4>, scalar_prefetch = 0 : i64, scratch_operands = 1 : i64, tpu.core_type = #tpu.core_type<tc>, window_params = [{transform_indices = @transform_0, window_bounds = array<i64: 1, 8, 32>}, {transform_indices = @transform_1, window_bounds = array<i64: 1, 8, 32>}, {transform_indices = @transform_2, window_bounds = array<i64: 1, 8, 32>}, {transform_indices = @transform_3, window_bounds = array<i64: 1, 1, 8, 8>}, {transform_indices = @transform_4, window_bounds = array<i64: 1, 32, 24>}, {transform_indices = @transform_5, window_bounds = array<i64: 1, 1, 24>}, {transform_indices = @transform_6, window_bounds = array<i64: 1, 8, 32>}, {pipeline_mode = #tpu.pipeline_mode<synchronous>, transform_indices = @transform_7, window_bounds = array<i64: 1, 32>}, {transform_indices = @transform_8, window_bounds = array<i64: 1, 8, 32>}]} {
    %c0 = arith.constant 0 : index
    %c0_0 = arith.constant 0 : index
    %c0_1 = arith.constant 0 : index
    %0 = vector.load %arg6[%c0, %c0_0, %c0_1] : memref<1x32x24xf32, #tpu.memory_space<vmem>>, vector<1x32x24xf32>
    %1 = vector.shape_cast %0 : vector<1x32x24xf32> to vector<32x24xf32>
    %c0_2 = arith.constant 0 : index
    %c0_3 = arith.constant 0 : index
    %c0_4 = arith.constant 0 : index
    %2 = vector.load %arg7[%c0_2, %c0_3, %c0_4] : memref<1x1x24xf32, #tpu.memory_space<vmem>>, vector<1x1x24xf32>
    %3 = vector.shape_cast %2 : vector<1x1x24xf32> to vector<1x24xf32>
    %c0_5 = arith.constant 0 : index
    %c0_6 = arith.constant 0 : index
    %c0_7 = arith.constant 0 : index
    %4 = vector.load %arg2[%c0_5, %c0_6, %c0_7] : memref<1x8x32xf32, #tpu.memory_space<vmem>>, vector<1x8x32xf32>
    %5 = vector.shape_cast %4 : vector<1x8x32xf32> to vector<8x32xf32>
    %6 = vector.extract_strided_slice %1 {offsets = [0, 0], sizes = [32, 8], strides = [1, 1]} : vector<32x24xf32> to vector<32x8xf32>
    %cst = arith.constant dense<0.000000e+00> : vector<8x8xf32>
    %7 = tpu.matmul %5, %6, %cst {dimension_numbers = #tpu.dot_dimension_numbers<[1], [0], [0], [1], [0, 0, 1, 1], [], []>} : vector<8x32xf32>, vector<32x8xf32>, vector<8x8xf32> -> vector<8x8xf32>
    %8 = vector.extract_strided_slice %3 {offsets = [0, 0], sizes = [1, 8], strides = [1, 1]} : vector<1x24xf32> to vector<1x8xf32>
    %9 = vector.broadcast %8 : vector<1x8xf32> to vector<8x8xf32>
    %10 = arith.addf %7, %9 : vector<8x8xf32>
    %c0_8 = arith.constant 0 : index
    %c0_9 = arith.constant 0 : index
    %c0_10 = arith.constant 0 : index
    %11 = vector.load %arg3[%c0_8, %c0_9, %c0_10] : memref<1x8x32xf32, #tpu.memory_space<vmem>>, vector<1x8x32xf32>
    %12 = vector.shape_cast %11 : vector<1x8x32xf32> to vector<8x32xf32>
    %13 = vector.extract_strided_slice %1 {offsets = [0, 8], sizes = [32, 8], strides = [1, 1]} : vector<32x24xf32> to vector<32x8xf32>
    %cst_11 = arith.constant dense<0.000000e+00> : vector<8x8xf32>
    %14 = tpu.matmul %12, %13, %cst_11 {dimension_numbers = #tpu.dot_dimension_numbers<[1], [0], [0], [1], [0, 0, 1, 1], [], []>} : vector<8x32xf32>, vector<32x8xf32>, vector<8x8xf32> -> vector<8x8xf32>
    %15 = vector.extract_strided_slice %3 {offsets = [0, 8], sizes = [1, 8], strides = [1, 1]} : vector<1x24xf32> to vector<1x8xf32>
    %16 = vector.broadcast %15 : vector<1x8xf32> to vector<8x8xf32>
    %17 = arith.addf %14, %16 : vector<8x8xf32>
    %c0_12 = arith.constant 0 : index
    %c0_13 = arith.constant 0 : index
    %c0_14 = arith.constant 0 : index
    %18 = vector.load %arg4[%c0_12, %c0_13, %c0_14] : memref<1x8x32xf32, #tpu.memory_space<vmem>>, vector<1x8x32xf32>
    %19 = vector.shape_cast %18 : vector<1x8x32xf32> to vector<8x32xf32>
    %20 = vector.extract_strided_slice %1 {offsets = [0, 16], sizes = [32, 8], strides = [1, 1]} : vector<32x24xf32> to vector<32x8xf32>
    %cst_15 = arith.constant dense<0.000000e+00> : vector<8x8xf32>
    %21 = tpu.matmul %19, %20, %cst_15 {dimension_numbers = #tpu.dot_dimension_numbers<[1], [0], [0], [1], [0, 0, 1, 1], [], []>} : vector<8x32xf32>, vector<32x8xf32>, vector<8x8xf32> -> vector<8x8xf32>
    %22 = vector.extract_strided_slice %3 {offsets = [0, 16], sizes = [1, 8], strides = [1, 1]} : vector<1x24xf32> to vector<1x8xf32>
    %23 = vector.broadcast %22 : vector<1x8xf32> to vector<8x8xf32>
    %24 = arith.addf %21, %23 : vector<8x8xf32>
    %cst_16 = arith.constant dense<0.000000e+00> : vector<8x8xf32>
    %25 = tpu.matmul %10, %17, %cst_16 {dimension_numbers = #tpu.dot_dimension_numbers<[1], [1], [0], [0], [0, 0, 1, 0], [], []>} : vector<8x8xf32>, vector<8x8xf32>, vector<8x8xf32> -> vector<8x8xf32>
    %c0_17 = arith.constant 0 : index
    %c0_18 = arith.constant 0 : index
    %c0_19 = arith.constant 0 : index
    %c0_20 = arith.constant 0 : index
    %26 = vector.load %arg5[%c0_17, %c0_18, %c0_19, %c0_20] : memref<1x1x8x8xf32, #tpu.memory_space<vmem>>, vector<1x1x8x8xf32>
    %27 = vector.shape_cast %26 : vector<1x1x8x8xf32> to vector<8x8xf32>
    %28 = arith.mulf %25, %27 : vector<8x8xf32>
    %cst_21 = arith.constant dense<0xFF800000> : vector<8xf32>
    %29 = vector.multi_reduction <maximumf>, %28, %cst_21 [1] : vector<8x8xf32> to vector<8xf32>
    %30 = vector.shape_cast %29 : vector<8xf32> to vector<8x1xf32>
    %31 = vector.broadcast %30 : vector<8x1xf32> to vector<8x8xf32>
    %32 = arith.subf %28, %31 : vector<8x8xf32>
    %33 = math.exp %32 : vector<8x8xf32>
    %cst_22 = arith.constant dense<0.000000e+00> : vector<8xf32>
    %34 = vector.multi_reduction <add>, %33, %cst_22 [1] : vector<8x8xf32> to vector<8xf32>
    %35 = vector.shape_cast %34 : vector<8xf32> to vector<8x1xf32>
    %36 = tpu.reciprocal %35 {approx = true} : vector<8x1xf32> -> vector<8x1xf32>
    %37 = vector.broadcast %36 : vector<8x1xf32> to vector<8x8xf32>
    %38 = arith.mulf %33, %37 : vector<8x8xf32>
    %cst_23 = arith.constant dense<0.000000e+00> : vector<8x8xf32>
    %39 = tpu.matmul %38, %24, %cst_23 {dimension_numbers = #tpu.dot_dimension_numbers<[1], [0], [0], [1], [0, 0, 1, 1], [], []>} : vector<8x8xf32>, vector<8x8xf32>, vector<8x8xf32> -> vector<8x8xf32>
    %c0_24 = arith.constant 0 : index
    %c0_25 = arith.constant 0 : index
    %c0_26 = arith.constant 0 : index
    %40 = vector.load %arg8[%c0_24, %c0_25, %c0_26] : memref<1x8x32xf32, #tpu.memory_space<vmem>>, vector<1x8x32xf32>
    %41 = vector.shape_cast %40 : vector<1x8x32xf32> to vector<8x32xf32>
    %cst_27 = arith.constant dense<0.000000e+00> : vector<8x32xf32>
    %42 = tpu.matmul %39, %41, %cst_27 {dimension_numbers = #tpu.dot_dimension_numbers<[1], [0], [0], [1], [0, 0, 1, 1], [], []>} : vector<8x8xf32>, vector<8x32xf32>, vector<8x32xf32> -> vector<8x32xf32>
    %c0_i32 = arith.constant 0 : i32
    %43 = arith.cmpi eq, %arg1, %c0_i32 : i32
    %44 = arith.extui %43 : i1 to i32
    %c0_i32_28 = arith.constant 0 : i32
    %45 = arith.cmpi ne, %44, %c0_i32_28 : i32
    scf.if %45 {
      %c0_32 = arith.constant 0 : index
      %c0_33 = arith.constant 0 : index
      %52 = vector.load %arg9[%c0_32, %c0_33] : memref<1x32xf32, #tpu.memory_space<vmem>>, vector<1x32xf32>
      %53 = vector.broadcast %52 : vector<1x32xf32> to vector<8x32xf32>
      %54 = arith.addf %42, %53 : vector<8x32xf32>
      %c0_34 = arith.constant 0 : index
      %c0_35 = arith.constant 0 : index
      %55 = vector.load %arg11[%c0_34, %c0_35] : memref<8x32xf32, #tpu.memory_space<vmem>>, vector<8x32xf32>
      tpu.vector_store %arg11[%c0_34, %c0_35], %54 {strides = array<i32>} : memref<8x32xf32, #tpu.memory_space<vmem>>, vector<8x32xf32>,
    } else {
    }
    %c0_i32_29 = arith.constant 0 : i32
    %46 = arith.cmpi sgt, %arg1, %c0_i32_29 : i32
    %47 = arith.extui %46 : i1 to i32
    %c0_i32_30 = arith.constant 0 : i32
    %48 = arith.cmpi ne, %47, %c0_i32_30 : i32
    scf.if %48 {
      %c0_32 = arith.constant 0 : index
      %c0_33 = arith.constant 0 : index
      %52 = vector.load %arg11[%c0_32, %c0_33] : memref<8x32xf32, #tpu.memory_space<vmem>>, vector<8x32xf32>
      %53 = arith.addf %52, %42 : vector<8x32xf32>
      %c0_34 = arith.constant 0 : index
      %c0_35 = arith.constant 0 : index
      %54 = vector.load %arg11[%c0_34, %c0_35] : memref<8x32xf32, #tpu.memory_space<vmem>>, vector<8x32xf32>
      tpu.vector_store %arg11[%c0_34, %c0_35], %53 {strides = array<i32>} : memref<8x32xf32, #tpu.memory_space<vmem>>, vector<8x32xf32>,
    } else {
    }
    %c3_i32 = arith.constant 3 : i32
    %49 = arith.cmpi eq, %arg1, %c3_i32 : i32
    %50 = arith.extui %49 : i1 to i32
    %c0_i32_31 = arith.constant 0 : i32
    %51 = arith.cmpi ne, %50, %c0_i32_31 : i32
    scf.if %51 {
      %c0_32 = arith.constant 0 : index
      %c0_33 = arith.constant 0 : index
      %52 = vector.load %arg11[%c0_32, %c0_33] : memref<8x32xf32, #tpu.memory_space<vmem>>, vector<8x32xf32>
      %c0_34 = arith.constant 0 : index
      %c0_35 = arith.constant 0 : index
      %c0_36 = arith.constant 0 : index
      %53 = vector.load %arg10[%c0_34, %c0_35, %c0_36] : memref<1x8x32xf32, #tpu.memory_space<vmem>>, vector<1x8x32xf32>
      %54 = vector.shape_cast %53 : vector<1x8x32xf32> to vector<8x32xf32>
      %55 = vector.shape_cast %52 : vector<8x32xf32> to vector<1x8x32xf32>
      tpu.vector_store %arg10[%c0_34, %c0_35, %c0_36], %55 {strides = array<i32>} : memref<1x8x32xf32, #tpu.memory_space<vmem>>, vector<1x8x32xf32>,
    } else {
    }
    return
  }
  func.func @transform_0(%arg0: i32, %arg1: i32) -> (i32, i32, i32) {
    %c0_i32 = arith.constant 0 : i32
    %c0_i32_0 = arith.constant 0 : i32
    %c0_i32_1 = arith.constant 0 : i32
    return %arg0, %c0_i32, %c0_i32_0 : i32, i32, i32
  }
  func.func @transform_1(%arg0: i32, %arg1: i32) -> (i32, i32, i32) {
    %c0_i32 = arith.constant 0 : i32
    %c0_i32_0 = arith.constant 0 : i32
    %c0_i32_1 = arith.constant 0 : i32
    return %arg0, %c0_i32, %c0_i32_0 : i32, i32, i32
  }
  func.func @transform_2(%arg0: i32, %arg1: i32) -> (i32, i32, i32) {
    %c0_i32 = arith.constant 0 : i32
    %c0_i32_0 = arith.constant 0 : i32
    %c0_i32_1 = arith.constant 0 : i32
    return %arg0, %c0_i32, %c0_i32_0 : i32, i32, i32
  }
  func.func @transform_3(%arg0: i32, %arg1: i32) -> (i32, i32, i32, i32) {
    %c0_i32 = arith.constant 0 : i32
    %c0_i32_0 = arith.constant 0 : i32
    %c0_i32_1 = arith.constant 0 : i32
    %c0_i32_2 = arith.constant 0 : i32
    return %arg0, %c0_i32, %c0_i32_0, %c0_i32_1 : i32, i32, i32, i32
  }
  func.func @transform_4(%arg0: i32, %arg1: i32) -> (i32, i32, i32) {
    %c0_i32 = arith.constant 0 : i32
    %c0_i32_0 = arith.constant 0 : i32
    %c0_i32_1 = arith.constant 0 : i32
    return %arg1, %c0_i32, %c0_i32_0 : i32, i32, i32
  }
  func.func @transform_5(%arg0: i32, %arg1: i32) -> (i32, i32, i32) {
    %c0_i32 = arith.constant 0 : i32
    %c0_i32_0 = arith.constant 0 : i32
    %c0_i32_1 = arith.constant 0 : i32
    return %arg1, %c0_i32, %c0_i32_0 : i32, i32, i32
  }
  func.func @transform_6(%arg0: i32, %arg1: i32) -> (i32, i32, i32) {
    %c0_i32 = arith.constant 0 : i32
    %c0_i32_0 = arith.constant 0 : i32
    %c0_i32_1 = arith.constant 0 : i32
    return %arg1, %c0_i32, %c0_i32_0 : i32, i32, i32
  }
  func.func @transform_7(%arg0: i32, %arg1: i32) -> (i32, i32) {
    %c0_i32 = arith.constant 0 : i32
    %c0_i32_0 = arith.constant 0 : i32
    %c0_i32_1 = arith.constant 0 : i32
    return %c0_i32, %c0_i32_0 : i32, i32
  }
  func.func @transform_8(%arg0: i32, %arg1: i32) -> (i32, i32, i32) {
    %c0_i32 = arith.constant 0 : i32
    %c0_i32_0 = arith.constant 0 : i32
    %c0_i32_1 = arith.constant 0 : i32
    return %arg0, %c0_i32, %c0_i32_0 : i32, i32, i32
  }
}

</mosaic_0001>

<llo_original>
// kernel: multihead_attention_forward.1
$region0: #{multihead_attention_forward.1}
  #allocation0 [shape = 'u32[]', space=smem, size = 0x4, offset = 0x4, fixed_abs, tag = 'smem constant byte address 0x4 - core index']
  #allocation1 [shape = 'u32[144,128]{1,0:T(1,128)}', space=vmem, size = 0x12000, scoped, tag = 'internal scratch']
  #allocation2 [shape = 'f32[8,32]{1,0:T(8,128)}', space=vmem, size = 0x1000, scoped, tag = 'scratch operand']
  %s0 = inlined_call_operand.vmem [shape: f32[2,8,32], index: 0, kind: input, shape index: {}]
  %s1 = inlined_call_operand.vmem [shape: f32[2,8,32], index: 1, kind: input, shape index: {}]
  %s2 = inlined_call_operand.vmem [shape: f32[2,8,32], index: 2, kind: input, shape index: {}]
  %s3 = inlined_call_operand.vmem [shape: f32[2,1,8,8], index: 3, kind: input, shape index: {}]
  %s4 = inlined_call_operand.vmem [shape: f32[4,32,24], index: 4, kind: input, shape index: {}]
  %s5 = inlined_call_operand.vmem [shape: f32[4,1,24], index: 5, kind: input, shape index: {}]
  %s6 = inlined_call_operand.vmem [shape: f32[4,8,32], index: 6, kind: input, shape index: {}]
  %s7 = inlined_call_operand.vmem [shape: f32[1,32], index: 7, kind: input, shape index: {}]
  %s8 = inlined_call_operand.hbm [shape: f32[2,8,32], index: 8, kind: output, shape index: {}]
  %s9 = sld [smem:[#allocation0]]
  $region77: #{multihead_attention_forward.1} parent=0
    _
  %s11 = ssub.s32 1, %s9
  %s12 = scalar_select 0, %s11, %s9
  $region1: #{multihead_attention_forward.1} parent=0
    #allocation3 [shape = 'u8[8192]{0}', space=vmem, size = 0x2000, scoped, tag = 'output window, operand 0']
    #allocation4 [shape = 's32[2]{0}', space=sflag, size = 0x8, scoped, tag = 'scoped memory for multihead_attention_forward.1']
    %13 = vsyncpa [#allocation4], 0
    %s14 = scalar_lea.sflag [#allocation4], 1
    %15 = vsyncpa %s14, 0
    loop: start=0, step=1, limit=10
    $region2: #{multihead_attention_forward.1} parent=1 // loop_pre_header
      _
    $region3: #{multihead_attention_forward.1} parent=1 // loop_header
      %s17 = sphi 0, %s21
      %p18 = scmp.ge.s32.totalorder %s17, 10
      %s24 = sphi 0, %s36
      %s25 = sphi 0, %s32
      %s26 = sphi 0, %s24
      %s27 = sphi 0, %s25
      %s28 = sphi 0, %s26
      %s29 = sphi 0, %s27
      %s39 = sphi 0, %s41
      %s42 = sphi 0, %s39
      %s43 = sphi 0, %s42
      %s59 = sphi 0, %s43
      %s65 = sphi 0, %s67
      %s68 = sphi 0, %s65
      %s69 = sphi 0, %s68
      %s85 = sphi 0, %s69
      %s91 = sphi 0, %s93
      %s94 = sphi 0, %s91
      %s95 = sphi 0, %s94
      %s111 = sphi 0, %s95
      %s117 = sphi 0, %s119
      %s120 = sphi 0, %s117
      %s121 = sphi 0, %s120
      %s137 = sphi 0, %s121
      %s143 = sphi 0, %s145
      %s146 = sphi 0, %s143
      %s147 = sphi 0, %s146
      %s163 = sphi 0, %s147
      %s169 = sphi 0, %s171
      %s172 = sphi 0, %s169
      %s173 = sphi 0, %s172
      %s189 = sphi 0, %s173
      %s195 = sphi 0, %s197
      %s198 = sphi 0, %s195
      %s199 = sphi 0, %s198
      %s215 = sphi 0, %s199
      %s219 = sphi 0, %s219
      %s221 = sphi 0, %s219
      %s222 = sphi 0, %s221
      %s236 = sphi 0, %s222
      %s242 = sphi 0, %s244
      %s245 = sphi 0, %s242
      %s246 = sphi 0, %s245
      %s262 = sphi 0, %s246
    $region4: #{multihead_attention_forward.1} parent=1 // loop_header_branch
      %20 = sbr.rel (%p18) target = $region8
    $region5: #{multihead_attention_forward.1} parent=1 // loop_body
      %s22 = ssub.s32 %s17, 1
      %s23 = ssub.s32 %s17, 2
      %s30 = sadd.s32 1, %s25
      %p31 = scmp.ge.s32.totalorder %s30, 4
      %s32 = scalar_select %p31, 0, %s30
      %s33 = sadd.s32 1, %s24
      %s34 = scalar_select %p31, %s33, %s24
      %p35 = scmp.ge.s32.totalorder %s34, 2
      %s36 = scalar_select %p35, 0, %s34
      %s37 = ssub.s32 %s24, %s36
      %p38 = scmp.eq.s32.totalorder %s37, 0
      %s40 = sadd.s32 %s39, 1
      %s41 = scalar_select %p38, %s39, %s40
      %p44 = pneg %p38
      %p45 = scmp.eq.s32.totalorder %s17, 7
      %p46 = por %p44, %p45
      %p47 = scmp.ne.s32.totalorder %s39, %s42
      %p48 = scmp.eq.s32.totalorder %s17, 0
      %p49 = por %p47, %p48
      %p50 = scmp.ne.s32.totalorder %s39, %s42
      %p51 = scmp.eq.s32.totalorder %s22, 7
      %p52 = por %p50, %p51
      %p53 = scmp.ne.s32.totalorder %s42, %s43
      %p54 = scmp.eq.s32.totalorder %s22, 0
      %p55 = por %p53, %p54
      %p56 = scmp.ne.s32.totalorder %s42, %s43
      %p57 = scmp.eq.s32.totalorder %s23, 7
      %p58 = por %p56, %p57
      %p60 = scmp.ne.s32.totalorder %s43, %s59
      %p61 = scmp.eq.s32.totalorder %s23, 0
      %p62 = por %p60, %p61
      %s63 = ssub.s32 %s24, %s36
      %p64 = scmp.eq.s32.totalorder %s63, 0
      %s66 = sadd.s32 %s65, 1
      %s67 = scalar_select %p64, %s65, %s66
      %p70 = pneg %p64
      %p71 = scmp.eq.s32.totalorder %s17, 7
      %p72 = por %p70, %p71
      %p73 = scmp.ne.s32.totalorder %s65, %s68
      %p74 = scmp.eq.s32.totalorder %s17, 0
      %p75 = por %p73, %p74
      %p76 = scmp.ne.s32.totalorder %s65, %s68
      %p77 = scmp.eq.s32.totalorder %s22, 7
      %p78 = por %p76, %p77
      %p79 = scmp.ne.s32.totalorder %s68, %s69
      %p80 = scmp.eq.s32.totalorder %s22, 0
      %p81 = por %p79, %p80
      %p82 = scmp.ne.s32.totalorder %s68, %s69
      %p83 = scmp.eq.s32.totalorder %s23, 7
      %p84 = por %p82, %p83
      %p86 = scmp.ne.s32.totalorder %s69, %s85
      %p87 = scmp.eq.s32.totalorder %s23, 0
      %p88 = por %p86, %p87
      %s89 = ssub.s32 %s24, %s36
      %p90 = scmp.eq.s32.totalorder %s89, 0
      %s92 = sadd.s32 %s91, 1
      %s93 = scalar_select %p90, %s91, %s92
      %p96 = pneg %p90
      %p97 = scmp.eq.s32.totalorder %s17, 7
      %p98 = por %p96, %p97
      %p99 = scmp.ne.s32.totalorder %s91, %s94
      %p100 = scmp.eq.s32.totalorder %s17, 0
      %p101 = por %p99, %p100
      %p102 = scmp.ne.s32.totalorder %s91, %s94
      %p103 = scmp.eq.s32.totalorder %s22, 7
      %p104 = por %p102, %p103
      %p105 = scmp.ne.s32.totalorder %s94, %s95
      %p106 = scmp.eq.s32.totalorder %s22, 0
      %p107 = por %p105, %p106
      %p108 = scmp.ne.s32.totalorder %s94, %s95
      %p109 = scmp.eq.s32.totalorder %s23, 7
      %p110 = por %p108, %p109
      %p112 = scmp.ne.s32.totalorder %s95, %s111
      %p113 = scmp.eq.s32.totalorder %s23, 0
      %p114 = por %p112, %p113
      %s115 = ssub.s32 %s24, %s36
      %p116 = scmp.eq.s32.totalorder %s115, 0
      %s118 = sadd.s32 %s117, 1
      %s119 = scalar_select %p116, %s117, %s118
      %p122 = pneg %p116
      %p123 = scmp.eq.s32.totalorder %s17, 7
      %p124 = por %p122, %p123
      %p125 = scmp.ne.s32.totalorder %s117, %s120
      %p126 = scmp.eq.s32.totalorder %s17, 0
      %p127 = por %p125, %p126
      %p128 = scmp.ne.s32.totalorder %s117, %s120
      %p129 = scmp.eq.s32.totalorder %s22, 7
      %p130 = por %p128, %p129
      %p131 = scmp.ne.s32.totalorder %s120, %s121
      %p132 = scmp.eq.s32.totalorder %s22, 0
      %p133 = por %p131, %p132
      %p134 = scmp.ne.s32.totalorder %s120, %s121
      %p135 = scmp.eq.s32.totalorder %s23, 7
      %p136 = por %p134, %p135
      %p138 = scmp.ne.s32.totalorder %s121, %s137
      %p139 = scmp.eq.s32.totalorder %s23, 0
      %p140 = por %p138, %p139
      %s141 = ssub.s32 %s25, %s32
      %p142 = scmp.eq.s32.totalorder %s141, 0
      %s144 = sadd.s32 %s143, 1
      %s145 = scalar_select %p142, %s143, %s144
      %p148 = pneg %p142
      %p149 = scmp.eq.s32.totalorder %s17, 7
      %p150 = por %p148, %p149
      %p151 = scmp.ne.s32.totalorder %s143, %s146
      %p152 = scmp.eq.s32.totalorder %s17, 0
      %p153 = por %p151, %p152
      %p154 = scmp.ne.s32.totalorder %s143, %s146
      %p155 = scmp.eq.s32.totalorder %s22, 7
      %p156 = por %p154, %p155
      %p157 = scmp.ne.s32.totalorder %s146, %s147
      %p158 = scmp.eq.s32.totalorder %s22, 0
      %p159 = por %p157, %p158
      %p160 = scmp.ne.s32.totalorder %s146, %s147
      %p161 = scmp.eq.s32.totalorder %s23, 7
      %p162 = por %p160, %p161
      %p164 = scmp.ne.s32.totalorder %s147, %s163
      %p165 = scmp.eq.s32.totalorder %s23, 0
      %p166 = por %p164, %p165
      %s167 = ssub.s32 %s25, %s32
      %p168 = scmp.eq.s32.totalorder %s167, 0
      %s170 = sadd.s32 %s169, 1
      %s171 = scalar_select %p168, %s169, %s170
      %p174 = pneg %p168
      %p175 = scmp.eq.s32.totalorder %s17, 7
      %p176 = por %p174, %p175
      %p177 = scmp.ne.s32.totalorder %s169, %s172
      %p178 = scmp.eq.s32.totalorder %s17, 0
      %p179 = por %p177, %p178
      %p180 = scmp.ne.s32.totalorder %s169, %s172
      %p181 = scmp.eq.s32.totalorder %s22, 7
      %p182 = por %p180, %p181
      %p183 = scmp.ne.s32.totalorder %s172, %s173
      %p184 = scmp.eq.s32.totalorder %s22, 0
      %p185 = por %p183, %p184
      %p186 = scmp.ne.s32.totalorder %s172, %s173
      %p187 = scmp.eq.s32.totalorder %s23, 7
      %p188 = por %p186, %p187
      %p190 = scmp.ne.s32.totalorder %s173, %s189
      %p191 = scmp.eq.s32.totalorder %s23, 0
      %p192 = por %p190, %p191
      %s193 = ssub.s32 %s25, %s32
      %p194 = scmp.eq.s32.totalorder %s193, 0
      %s196 = sadd.s32 %s195, 1
      %s197 = scalar_select %p194, %s195, %s196
      %p200 = pneg %p194
      %p201 = scmp.eq.s32.totalorder %s17, 7
      %p202 = por %p200, %p201
      %p203 = scmp.ne.s32.totalorder %s195, %s198
      %p204 = scmp.eq.s32.totalorder %s17, 0
      %p205 = por %p203, %p204
      %p206 = scmp.ne.s32.totalorder %s195, %s198
      %p207 = scmp.eq.s32.totalorder %s22, 7
      %p208 = por %p206, %p207
      %p209 = scmp.ne.s32.totalorder %s198, %s199
      %p210 = scmp.eq.s32.totalorder %s22, 0
      %p211 = por %p209, %p210
      %p212 = scmp.ne.s32.totalorder %s198, %s199
      %p213 = scmp.eq.s32.totalorder %s23, 7
      %p214 = por %p212, %p213
      %p216 = scmp.ne.s32.totalorder %s199, %s215
      %p217 = scmp.eq.s32.totalorder %s23, 0
      %p218 = por %p216, %p217
      %s220 = sadd.s32 %s219, 1
      %p223 = scmp.eq.s32.totalorder %s17, 7
      %p224 = scmp.ne.s32.totalorder %s219, %s221
      %p225 = scmp.eq.s32.totalorder %s17, 0
      %p226 = por %p224, %p225
      %p227 = scmp.ne.s32.totalorder %s219, %s221
      %p228 = scmp.eq.s32.totalorder %s22, 7
      %p229 = por %p227, %p228
      %p230 = scmp.ne.s32.totalorder %s221, %s222
      %p231 = scmp.eq.s32.totalorder %s22, 0
      %p232 = por %p230, %p231
      %p233 = scmp.ne.s32.totalorder %s221, %s222
      %p234 = scmp.eq.s32.totalorder %s23, 7
      %p235 = por %p233, %p234
      %p237 = scmp.ne.s32.totalorder %s222, %s236
      %p238 = scmp.eq.s32.totalorder %s23, 0
      %p239 = por %p237, %p238
      %s240 = ssub.s32 %s24, %s36
      %p241 = scmp.eq.s32.totalorder %s240, 0
      %s243 = sadd.s32 %s242, 1
      %s244 = scalar_select %p241, %s242, %s243
      %p247 = pneg %p241
      %p248 = scmp.eq.s32.totalorder %s17, 7
      %p249 = por %p247, %p248
      %p250 = scmp.ne.s32.totalorder %s242, %s245
      %p251 = scmp.eq.s32.totalorder %s17, 0
      %p252 = por %p250, %p251
      %p253 = scmp.ne.s32.totalorder %s242, %s245
      %p254 = scmp.eq.s32.totalorder %s22, 7
      %p255 = por %p253, %p254
      %p256 = scmp.ne.s32.totalorder %s245, %s246
      %p257 = scmp.eq.s32.totalorder %s22, 0
      %p258 = por %p256, %p257
      %p259 = scmp.ne.s32.totalorder %s245, %s246
      %p260 = scmp.eq.s32.totalorder %s23, 7
      %p261 = por %p259, %p260
      %p263 = scmp.ne.s32.totalorder %s246, %s262
      %p264 = scmp.eq.s32.totalorder %s23, 0
      %p265 = por %p263, %p264
      %p266 = scmp.le.s32.totalorder 1, %s17
      %p267 = scmp.lt.s32.totalorder %s17, 9
      %p268 = pnand %p266, %p267
      %p269 = pneg %p268
      // Predicated region
      $region9: #{multihead_attention_forward.1} parent=5 // pred_check
        _
      $region10: #{multihead_attention_forward.1} parent=5 // pred_check_branch
        %271 = sbr.rel (%p268) target = $region12
      $region11: #{multihead_attention_forward.1} parent=5 // pred_region
        %s272 = ssub.s32 %s17, 1
        // Predicated region
        $region13: #{multihead_attention_forward.1} parent=11 // pred_check
          %p273 = pneg %p232
        $region14: #{multihead_attention_forward.1} parent=11 // pred_check_branch
          %275 = sbr.rel (%p273) target = $region16
        $region15: #{multihead_attention_forward.1} parent=11 // pred_region
          _
        $region16: #{multihead_attention_forward.1} parent=11 // pred_fallthru
          _
      $region12: #{multihead_attention_forward.1} parent=5 // pred_fallthru
        _
      %p276 = scmp.lt.s32.totalorder %s17, 8
      // Predicated region
      $region17: #{multihead_attention_forward.1} parent=5 // pred_check
        %p277 = pneg %p276
      $region18: #{multihead_attention_forward.1} parent=5 // pred_check_branch
        %279 = sbr.rel (%p277) target = $region20
      $region19: #{multihead_attention_forward.1} parent=5 // pred_region
        // Predicated region
        $region21: #{multihead_attention_forward.1} parent=19 // pred_check
          %p280 = pneg %p49
        $region22: #{multihead_attention_forward.1} parent=19 // pred_check_branch
          %282 = sbr.rel (%p280) target = $region24
        $region23: #{multihead_attention_forward.1} parent=19 // pred_region
          %p283 = scmp.lt.s32.totalorder %s24, 1
          %s284 = scalar_select %p283, %s24, 1
          %s285 = smul.addr %s284, 8
          %s286 = scalar_lea.vmem %s0, %s285
        $region24: #{multihead_attention_forward.1} parent=19 // pred_fallthru
          _
        // Predicated region
        $region25: #{multihead_attention_forward.1} parent=19 // pred_check
          %p287 = pneg %p75
        $region26: #{multihead_attention_forward.1} parent=19 // pred_check_branch
          %289 = sbr.rel (%p287) target = $region28
        $region27: #{multihead_attention_forward.1} parent=19 // pred_region
          %p290 = scmp.lt.s32.totalorder %s24, 1
          %s291 = scalar_select %p290, %s24, 1
          %s292 = smul.addr %s291, 8
          %s293 = scalar_lea.vmem %s1, %s292
        $region28: #{multihead_attention_forward.1} parent=19 // pred_fallthru
          _
        // Predicated region
        $region29: #{multihead_attention_forward.1} parent=19 // pred_check
          %p294 = pneg %p101
        $region30: #{multihead_attention_forward.1} parent=19 // pred_check_branch
          %296 = sbr.rel (%p294) target = $region32
        $region31: #{multihead_attention_forward.1} parent=19 // pred_region
          %p297 = scmp.lt.s32.totalorder %s24, 1
          %s298 = scalar_select %p297, %s24, 1
          %s299 = smul.addr %s298, 8
          %s300 = scalar_lea.vmem %s2, %s299
        $region32: #{multihead_attention_forward.1} parent=19 // pred_fallthru
          _
        // Predicated region
        $region33: #{multihead_attention_forward.1} parent=19 // pred_check
          %p301 = pneg %p127
        $region34: #{multihead_attention_forward.1} parent=19 // pred_check_branch
          %303 = sbr.rel (%p301) target = $region36
        $region35: #{multihead_attention_forward.1} parent=19 // pred_region
          %p304 = scmp.lt.s32.totalorder %s24, 1
          %s305 = scalar_select %p304, %s24, 1
          %s306 = smul.addr %s305, 8
          %s307 = scalar_lea.vmem %s3, %s306
        $region36: #{multihead_attention_forward.1} parent=19 // pred_fallthru
          _
        // Predicated region
        $region37: #{multihead_attention_forward.1} parent=19 // pred_check
          %p308 = pneg %p153
        $region38: #{multihead_attention_forward.1} parent=19 // pred_check_branch
          %310 = sbr.rel (%p308) target = $region40
        $region39: #{multihead_attention_forward.1} parent=19 // pred_region
          %p311 = scmp.lt.s32.totalorder %s25, 3
          %s312 = scalar_select %p311, %s25, 3
          %s313 = smul.addr %s312, 4
          %s314 = smul.addr %s313, 8
          %s315 = scalar_lea.vmem %s4, %s314
        $region40: #{multihead_attention_forward.1} parent=19 // pred_fallthru
          _
        // Predicated region
        $region41: #{multihead_attention_forward.1} parent=19 // pred_check
          %p316 = pneg %p179
        $region42: #{multihead_attention_forward.1} parent=19 // pred_check_branch
          %318 = sbr.rel (%p316) target = $region44
        $region43: #{multihead_attention_forward.1} parent=19 // pred_region
          %p319 = scmp.lt.s32.totalorder %s25, 3
          %s320 = scalar_select %p319, %s25, 3
          %s321 = scalar_lea.vmem %s5, %s320
        $region44: #{multihead_attention_forward.1} parent=19 // pred_fallthru
          _
        // Predicated region
        $region45: #{multihead_attention_forward.1} parent=19 // pred_check
          %p322 = pneg %p205
        $region46: #{multihead_attention_forward.1} parent=19 // pred_check_branch
          %324 = sbr.rel (%p322) target = $region48
        $region47: #{multihead_attention_forward.1} parent=19 // pred_region
          %p325 = scmp.lt.s32.totalorder %s25, 3
          %s326 = scalar_select %p325, %s25, 3
          %s327 = smul.addr %s326, 8
          %s328 = scalar_lea.vmem %s6, %s327
        $region48: #{multihead_attention_forward.1} parent=19 // pred_fallthru
          _
      $region20: #{multihead_attention_forward.1} parent=5 // pred_fallthru
        _
      %p329 = scmp.le.s32.totalorder 1, %s17
      %p330 = scmp.lt.s32.totalorder %s17, 9
      %p331 = pnand %p329, %p330
      %p332 = pneg %p331
      // Predicated region
      $region49: #{multihead_attention_forward.1} parent=5 // pred_check
        _
      $region50: #{multihead_attention_forward.1} parent=5 // pred_check_branch
        %334 = sbr.rel (%p331) target = $region52
      $region51: #{multihead_attention_forward.1} parent=5 // pred_region
        %s335 = ssub.s32 %s17, 1
        %p336 = scmp.lt.s32.totalorder %s26, 1
        %s337 = scalar_select %p336, %s26, 1
        %s338 = smul.addr %s337, 8
        %s339 = scalar_lea.vmem %s0, %s338
        %p340 = pneg %p55
        %p341 = pneg %p52
        %p342 = scmp.lt.s32.totalorder %s26, 1
        %s343 = scalar_select %p342, %s26, 1
        %s344 = smul.addr %s343, 8
        %s345 = scalar_lea.vmem %s1, %s344
        %p346 = pneg %p81
        %p347 = pneg %p78
        %p348 = scmp.lt.s32.totalorder %s26, 1
        %s349 = scalar_select %p348, %s26, 1
        %s350 = smul.addr %s349, 8
        %s351 = scalar_lea.vmem %s2, %s350
        %p352 = pneg %p107
        %p353 = pneg %p104
        %p354 = scmp.lt.s32.totalorder %s26, 1
        %s355 = scalar_select %p354, %s26, 1
        %s356 = smul.addr %s355, 8
        %s357 = scalar_lea.vmem %s3, %s356
        %p358 = pneg %p133
        %p359 = pneg %p130
        %p360 = scmp.lt.s32.totalorder %s27, 3
        %s361 = scalar_select %p360, %s27, 3
        %s362 = smul.addr %s361, 4
        %s363 = smul.addr %s362, 8
        %s364 = scalar_lea.vmem %s4, %s363
        %p365 = pneg %p159
        %p366 = pneg %p156
        %p367 = scmp.lt.s32.totalorder %s27, 3
        %s368 = scalar_select %p367, %s27, 3
        %s369 = scalar_lea.vmem %s5, %s368
        %p370 = pneg %p185
        %p371 = pneg %p182
        %p372 = scmp.lt.s32.totalorder %s27, 3
        %s373 = scalar_select %p372, %s27, 3
        %s374 = smul.addr %s373, 8
        %s375 = scalar_lea.vmem %s6, %s374
        %p376 = pneg %p211
        %p377 = pneg %p208
        %p378 = pneg %p232
        %p379 = pneg %p229
        %p380 = pneg %p258
        %p381 = pneg %p255
        %s382 = sand.u32 %s245, 1
        %s383 = scalar_lea.sflag [#allocation4], %s382
        %s384 = sand.u32 %s245, 1
        %s385 = smul.addr %s384, 8
        %s386 = scalar_lea.vmem [#allocation3], %s385
        %p387 = scmp.lt.s32.totalorder %s26, 1
        %s388 = scalar_select %p387, %s26, 1
        %s389 = smul.addr %s388, 8
        %s390 = scalar_lea.vmem %s0, %s389
        %p391 = scmp.lt.s32.totalorder %s26, 1
        %s392 = scalar_select %p391, %s26, 1
        %s393 = smul.addr %s392, 8
        %s394 = scalar_lea.vmem %s1, %s393
        %p395 = scmp.lt.s32.totalorder %s26, 1
        %s396 = scalar_select %p395, %s26, 1
        %s397 = smul.addr %s396, 8
        %s398 = scalar_lea.vmem %s2, %s397
        %p399 = scmp.lt.s32.totalorder %s26, 1
        %s400 = scalar_select %p399, %s26, 1
        %s401 = smul.addr %s400, 8
        %s402 = scalar_lea.vmem %s3, %s401
        %p403 = scmp.lt.s32.totalorder %s27, 3
        %s404 = scalar_select %p403, %s27, 3
        %s405 = smul.addr %s404, 4
        %s406 = smul.addr %s405, 8
        %s407 = scalar_lea.vmem %s4, %s406
        %p408 = scmp.lt.s32.totalorder %s27, 3
        %s409 = scalar_select %p408, %s27, 3
        %s410 = scalar_lea.vmem %s5, %s409
        %p411 = scmp.lt.s32.totalorder %s27, 3
        %s412 = scalar_select %p411, %s27, 3
        %s413 = smul.addr %s412, 8
        %s414 = scalar_lea.vmem %s6, %s413
        %v415 = vld [vmem:[%s407] sm:$0xff]
        %v416 = vld [vmem:[%s407 + $0x8] sm:$0xff]
        %v417 = vld [vmem:[%s407 + $0x10] sm:$0xff]
        %v418 = vld [vmem:[%s407 + $0x18] sm:$0xff]
        %v419 = vld [vmem:[%s410] sm:$0x1]
        %v420 = vld [vmem:[%s390] sm:$0xff]
        %v422 = vlaneseq
        %v423 = vshrl.u32 %v422, 7
        %v424 = vsub.s32 0, %v423
        %v425 = vrot.slane %v419, %v424
        %vm427 = vcmask 261120
        %v429 = vsel %vm427, %v420, 0
        %431 = vmatprep.subr.mxu0 0.0
        %432 = vmatpush1.msra.mxu0 %v415
        %433 = vmatprep.subr.mxu0 0.0
        %434 = vmatpush1.msra.mxu0 %v416
        %435 = vmatprep.subr.mxu0 0.0
        %436 = vmatpush1.msra.mxu0 %v417
        %437 = vmatprep.subr.mxu0 0.0
        %438 = vmatpush1.msra.mxu0 %v418
        %439 = vmatprep.subr.mxu0 0.0
        %440 = vmatpush1.msra.mxu0 0.0
        %441 = vmatprep.subr.mxu0 0.0
        %442 = vmatpush1.msra.mxu0 0.0
        %443 = vmatprep.subr.mxu0 0.0
        %444 = vmatpush1.msra.mxu0 0.0
        %445 = vmatprep.subr.mxu0 0.0
        %446 = vmatpush1.msra.mxu0 0.0
        %447 = vmatprep.subr.mxu0 0.0
        %448 = vmatpush1.msra.mxu0 0.0
        %449 = vmatprep.subr.mxu0 0.0
        %450 = vmatpush1.msra.mxu0 0.0
        %451 = vmatprep.subr.mxu0 0.0
        %452 = vmatpush1.msra.mxu0 0.0
        %453 = vmatprep.subr.mxu0 0.0
        %454 = vmatpush1.msra.mxu0 0.0
        %455 = vmatprep.subr.mxu0 0.0
        %456 = vmatpush1.msra.mxu0 0.0
        %457 = vmatprep.subr.mxu0 0.0
        %458 = vmatpush1.msra.mxu0 0.0
        %459 = vmatprep.subr.mxu0 0.0
        %460 = vmatpush1.msra.mxu0 0.0
        %461 = vmatprep.subr.mxu0 0.0
        %462 = vmatpush1.msra.mxu0 0.0
        %463 = vmatprep.subr.mxu0 0.0
        %464 = vmatpush1.msra.mxu0 0.0
        %465 = vmatprep.subr.mxu0 0.0
        %466 = vmatpush1.msra.mxu0 0.0
        %467 = vmatprep.subr.mxu0 0.0
        %468 = vmatpush1.msra.mxu0 0.0
        %469 = vmatprep.subr.mxu0 0.0
        %470 = vmatpush1.msra.mxu0 0.0
        %471 = vmatprep.subr.mxu0 0.0
        %472 = vmatpush1.msra.mxu0 0.0
        %473 = vmatprep.subr.mxu0 0.0
        %474 = vmatpush1.msra.mxu0 0.0
        %475 = vmatprep.subr.mxu0 0.0
        %476 = vmatpush1.msra.mxu0 0.0
        %477 = vmatprep.subr.mxu0 0.0
        %478 = vmatpush1.msra.mxu0 0.0
        %479 = vmatprep.subr.mxu0 0.0
        %480 = vmatpush1.msra.mxu0 0.0
        %481 = vmatprep.subr.mxu0 0.0
        %482 = vmatpush1.msra.mxu0 0.0
        %483 = vmatprep.subr.mxu0 0.0
        %484 = vmatpush1.msra.mxu0 0.0
        %485 = vmatprep.subr.mxu0 0.0
        %486 = vmatpush1.msra.mxu0 0.0
        %487 = vmatprep.subr.mxu0 0.0
        %488 = vmatpush1.msra.mxu0 0.0
        %489 = vmatprep.subr.mxu0 0.0
        %490 = vmatpush1.msra.mxu0 0.0
        %491 = vmatprep.subr.mxu0 0.0
        %492 = vmatpush1.msra.mxu0 0.0
        %493 = vmatprep.subr.mxu0 0.0
        %494 = vmatpush1.msra.mxu0 0.0
        %495 = vmatprep.mubr.f32.mxu0 0.0
        %496 = vmatmul.mubr.f32.gmra.mrb[0].mxu0 %v429
        %v497 = vpop.f32.mrb[0].mxu0
        %v498 = vadd.f32 %v425, %v497
        %v499 = vpop.f32.mrb[0].mxu0
        %500 = vdwg.mxu0
        %v501 = vld [vmem:[%s394] sm:$0xff]
        %506 = vrot.lane.b32.xlu0 %v415, 120
        %v507 = vpop.permute.xlu0 %506
        %508 = vrot.lane.b32.xlu0 %v416, 120
        %v509 = vpop.permute.xlu0 %508
        %510 = vrot.lane.b32.xlu0 %v417, 120
        %v511 = vpop.permute.xlu0 %510
        %512 = vrot.lane.b32.xlu0 %v418, 120
        %v513 = vpop.permute.xlu0 %512
        %518 = vrot.lane.b32.xlu0 %v425, 120
        %v519 = vpop.permute.xlu0 %518
        %v522 = vsel %vm427, %v501, 0
        %524 = vmatprep.subr.mxu0 0.0
        %525 = vmatpush1.msra.mxu0 %v507
        %526 = vmatprep.subr.mxu0 0.0
        %527 = vmatpush1.msra.mxu0 %v509
        %528 = vmatprep.subr.mxu0 0.0
        %529 = vmatpush1.msra.mxu0 %v511
        %530 = vmatprep.subr.mxu0 0.0
        %531 = vmatpush1.msra.mxu0 %v513
        %532 = vmatprep.subr.mxu0 0.0
        %533 = vmatpush1.msra.mxu0 0.0
        %534 = vmatprep.subr.mxu0 0.0
        %535 = vmatpush1.msra.mxu0 0.0
        %536 = vmatprep.subr.mxu0 0.0
        %537 = vmatpush1.msra.mxu0 0.0
        %538 = vmatprep.subr.mxu0 0.0
        %539 = vmatpush1.msra.mxu0 0.0
        %540 = vmatprep.subr.mxu0 0.0
        %541 = vmatpush1.msra.mxu0 0.0
        %542 = vmatprep.subr.mxu0 0.0
        %543 = vmatpush1.msra.mxu0 0.0
        %544 = vmatprep.subr.mxu0 0.0
        %545 = vmatpush1.msra.mxu0 0.0
        %546 = vmatprep.subr.mxu0 0.0
        %547 = vmatpush1.msra.mxu0 0.0
        %548 = vmatprep.subr.mxu0 0.0
        %549 = vmatpush1.msra.mxu0 0.0
        %550 = vmatprep.subr.mxu0 0.0
        %551 = vmatpush1.msra.mxu0 0.0
        %552 = vmatprep.subr.mxu0 0.0
        %553 = vmatpush1.msra.mxu0 0.0
        %554 = vmatprep.subr.mxu0 0.0
        %555 = vmatpush1.msra.mxu0 0.0
        %556 = vmatprep.subr.mxu0 0.0
        %557 = vmatpush1.msra.mxu0 0.0
        %558 = vmatprep.subr.mxu0 0.0
        %559 = vmatpush1.msra.mxu0 0.0
        %560 = vmatprep.subr.mxu0 0.0
        %561 = vmatpush1.msra.mxu0 0.0
        %562 = vmatprep.subr.mxu0 0.0
        %563 = vmatpush1.msra.mxu0 0.0
        %564 = vmatprep.subr.mxu0 0.0
        %565 = vmatpush1.msra.mxu0 0.0
        %566 = vmatprep.subr.mxu0 0.0
        %567 = vmatpush1.msra.mxu0 0.0
        %568 = vmatprep.subr.mxu0 0.0
        %569 = vmatpush1.msra.mxu0 0.0
        %570 = vmatprep.subr.mxu0 0.0
        %571 = vmatpush1.msra.mxu0 0.0
        %572 = vmatprep.subr.mxu0 0.0
        %573 = vmatpush1.msra.mxu0 0.0
        %574 = vmatprep.subr.mxu0 0.0
        %575 = vmatpush1.msra.mxu0 0.0
        %576 = vmatprep.subr.mxu0 0.0
        %577 = vmatpush1.msra.mxu0 0.0
        %578 = vmatprep.subr.mxu0 0.0
        %579 = vmatpush1.msra.mxu0 0.0
        %580 = vmatprep.subr.mxu0 0.0
        %581 = vmatpush1.msra.mxu0 0.0
        %582 = vmatprep.subr.mxu0 0.0
        %583 = vmatpush1.msra.mxu0 0.0
        %584 = vmatprep.subr.mxu0 0.0
        %585 = vmatpush1.msra.mxu0 0.0
        %586 = vmatprep.subr.mxu0 0.0
        %587 = vmatpush1.msra.mxu0 0.0
        %588 = vmatprep.mubr.f32.mxu0 0.0
        %589 = vmatmul.mubr.f32.gmra.mrb[0].mxu0 %v522
        %v590 = vpop.f32.mrb[0].mxu0
        %v591 = vadd.f32 %v519, %v590
        %v592 = vpop.f32.mrb[0].mxu0
        %593 = vdwg.mxu0
        %v594 = vld [vmem:[%s398] sm:$0xff]
        %595 = vrot.lane.b32.xlu0 %v415, 112
        %v596 = vpop.permute.xlu0 %595
        %597 = vrot.lane.b32.xlu0 %v416, 112
        %v598 = vpop.permute.xlu0 %597
        %599 = vrot.lane.b32.xlu0 %v417, 112
        %v600 = vpop.permute.xlu0 %599
        %601 = vrot.lane.b32.xlu0 %v418, 112
        %v602 = vpop.permute.xlu0 %601
        %607 = vrot.lane.b32.xlu0 %v425, 112
        %v608 = vpop.permute.xlu0 %607
        %v611 = vsel %vm427, %v594, 0
        %613 = vmatprep.subr.mxu0 0.0
        %614 = vmatpush1.msra.mxu0 %v596
        %615 = vmatprep.subr.mxu0 0.0
        %616 = vmatpush1.msra.mxu0 %v598
        %617 = vmatprep.subr.mxu0 0.0
        %618 = vmatpush1.msra.mxu0 %v600
        %619 = vmatprep.subr.mxu0 0.0
        %620 = vmatpush1.msra.mxu0 %v602
        %621 = vmatprep.subr.mxu0 0.0
        %622 = vmatpush1.msra.mxu0 0.0
        %623 = vmatprep.subr.mxu0 0.0
        %624 = vmatpush1.msra.mxu0 0.0
        %625 = vmatprep.subr.mxu0 0.0
        %626 = vmatpush1.msra.mxu0 0.0
        %627 = vmatprep.subr.mxu0 0.0
        %628 = vmatpush1.msra.mxu0 0.0
        %629 = vmatprep.subr.mxu0 0.0
        %630 = vmatpush1.msra.mxu0 0.0
        %631 = vmatprep.subr.mxu0 0.0
        %632 = vmatpush1.msra.mxu0 0.0
        %633 = vmatprep.subr.mxu0 0.0
        %634 = vmatpush1.msra.mxu0 0.0
        %635 = vmatprep.subr.mxu0 0.0
        %636 = vmatpush1.msra.mxu0 0.0
        %637 = vmatprep.subr.mxu0 0.0
        %638 = vmatpush1.msra.mxu0 0.0
        %639 = vmatprep.subr.mxu0 0.0
        %640 = vmatpush1.msra.mxu0 0.0
        %641 = vmatprep.subr.mxu0 0.0
        %642 = vmatpush1.msra.mxu0 0.0
        %643 = vmatprep.subr.mxu0 0.0
        %644 = vmatpush1.msra.mxu0 0.0
        %645 = vmatprep.subr.mxu0 0.0
        %646 = vmatpush1.msra.mxu0 0.0
        %647 = vmatprep.subr.mxu0 0.0
        %648 = vmatpush1.msra.mxu0 0.0
        %649 = vmatprep.subr.mxu0 0.0
        %650 = vmatpush1.msra.mxu0 0.0
        %651 = vmatprep.subr.mxu0 0.0
        %652 = vmatpush1.msra.mxu0 0.0
        %653 = vmatprep.subr.mxu0 0.0
        %654 = vmatpush1.msra.mxu0 0.0
        %655 = vmatprep.subr.mxu0 0.0
        %656 = vmatpush1.msra.mxu0 0.0
        %657 = vmatprep.subr.mxu0 0.0
        %658 = vmatpush1.msra.mxu0 0.0
        %659 = vmatprep.subr.mxu0 0.0
        %660 = vmatpush1.msra.mxu0 0.0
        %661 = vmatprep.subr.mxu0 0.0
        %662 = vmatpush1.msra.mxu0 0.0
        %663 = vmatprep.subr.mxu0 0.0
        %664 = vmatpush1.msra.mxu0 0.0
        %665 = vmatprep.subr.mxu0 0.0
        %666 = vmatpush1.msra.mxu0 0.0
        %667 = vmatprep.subr.mxu0 0.0
        %668 = vmatpush1.msra.mxu0 0.0
        %669 = vmatprep.subr.mxu0 0.0
        %670 = vmatpush1.msra.mxu0 0.0
        %671 = vmatprep.subr.mxu0 0.0
        %672 = vmatpush1.msra.mxu0 0.0
        %673 = vmatprep.subr.mxu0 0.0
        %674 = vmatpush1.msra.mxu0 0.0
        %675 = vmatprep.subr.mxu0 0.0
        %676 = vmatpush1.msra.mxu0 0.0
        %677 = vmatprep.mubr.f32.mxu0 0.0
        %678 = vmatmul.mubr.f32.gmra.mrb[0].mxu0 %v611
        %v679 = vpop.f32.mrb[0].mxu0
        %v680 = vadd.f32 %v608, %v679
        %v681 = vpop.f32.mrb[0].mxu0
        %682 = vdwg.mxu0
        %vm683 = vcmask 64512
        %v685 = vsel %vm683, %v498, 0
        %v688 = vsel %vm683, %v591, 0
        %690 = vmatprep.subr.mxu0 0.0
        %691 = vmatpush1.xpose.msra.mxu0 %v688
        %692 = vmatprep.subr.mxu0 0.0
        %693 = vmatpush1.xpose.msra.mxu0 0.0
        %694 = vmatprep.subr.mxu0 0.0
        %695 = vmatpush1.xpose.msra.mxu0 0.0
        %696 = vmatprep.subr.mxu0 0.0
        %697 = vmatpush1.xpose.msra.mxu0 0.0
        %698 = vmatprep.subr.mxu0 0.0
        %699 = vmatpush1.xpose.msra.mxu0 0.0
        %700 = vmatprep.subr.mxu0 0.0
        %701 = vmatpush1.xpose.msra.mxu0 0.0
        %702 = vmatprep.subr.mxu0 0.0
        %703 = vmatpush1.xpose.msra.mxu0 0.0
        %704 = vmatprep.subr.mxu0 0.0
        %705 = vmatpush1.xpose.msra.mxu0 0.0
        %706 = vmatprep.subr.mxu0 0.0
        %707 = vmatpush1.xpose.msra.mxu0 0.0
        %708 = vmatprep.subr.mxu0 0.0
        %709 = vmatpush1.xpose.msra.mxu0 0.0
        %710 = vmatprep.subr.mxu0 0.0
        %711 = vmatpush1.xpose.msra.mxu0 0.0
        %712 = vmatprep.subr.mxu0 0.0
        %713 = vmatpush1.xpose.msra.mxu0 0.0
        %714 = vmatprep.subr.mxu0 0.0
        %715 = vmatpush1.xpose.msra.mxu0 0.0
        %716 = vmatprep.subr.mxu0 0.0
        %717 = vmatpush1.xpose.msra.mxu0 0.0
        %718 = vmatprep.subr.mxu0 0.0
        %719 = vmatpush1.xpose.msra.mxu0 0.0
        %720 = vmatprep.subr.mxu0 0.0
        %721 = vmatpush1.xpose.msra.mxu0 0.0
        %722 = vmatprep.subr.mxu0 0.0
        %723 = vmatpush1.xpose.msra.mxu0 0.0
        %724 = vmatprep.subr.mxu0 0.0
        %725 = vmatpush1.xpose.msra.mxu0 0.0
        %726 = vmatprep.subr.mxu0 0.0
        %727 = vmatpush1.xpose.msra.mxu0 0.0
        %728 = vmatprep.subr.mxu0 0.0
        %729 = vmatpush1.xpose.msra.mxu0 0.0
        %730 = vmatprep.subr.mxu0 0.0
        %731 = vmatpush1.xpose.msra.mxu0 0.0
        %732 = vmatprep.subr.mxu0 0.0
        %733 = vmatpush1.xpose.msra.mxu0 0.0
        %734 = vmatprep.subr.mxu0 0.0
        %735 = vmatpush1.xpose.msra.mxu0 0.0
        %736 = vmatprep.subr.mxu0 0.0
        %737 = vmatpush1.xpose.msra.mxu0 0.0
        %738 = vmatprep.subr.mxu0 0.0
        %739 = vmatpush1.xpose.msra.mxu0 0.0
        %740 = vmatprep.subr.mxu0 0.0
        %741 = vmatpush1.xpose.msra.mxu0 0.0
        %742 = vmatprep.subr.mxu0 0.0
        %743 = vmatpush1.xpose.msra.mxu0 0.0
        %744 = vmatprep.subr.mxu0 0.0
        %745 = vmatpush1.xpose.msra.mxu0 0.0
        %746 = vmatprep.subr.mxu0 0.0
        %747 = vmatpush1.xpose.msra.mxu0 0.0
        %748 = vmatprep.subr.mxu0 0.0
        %749 = vmatpush1.xpose.msra.mxu0 0.0
        %750 = vmatprep.subr.mxu0 0.0
        %751 = vmatpush1.xpose.msra.mxu0 0.0
        %752 = vmatprep.subr.mxu0 0.0
        %753 = vmatpush1.xpose.msra.mxu0 0.0
        %754 = vmatprep.mubr.f32.mxu0 0.0
        %755 = vmatmul.mubr.f32.gmra.mrb[0].mxu0 %v685
        %v756 = vpop.f32.mrb[0].mxu0
        %v757 = vadd.f32 0.0, %v756
        %v758 = vpop.f32.mrb[0].mxu0
        %759 = vdwg.mxu0
        %v760 = vld [vmem:[%s402] sm:$0xff]
        %v761 = vmul.f32 %v757, %v760
        %v762 = vsel %vm683, %v761, -inf
        %763 = vmax.xlane.f32.xlu0 %v762
        %v764 = vpop.xlane.xlu0 %763
        %v765 = vsub.f32 %v761, %v764
        %v766 = vmul.f32 %v765, 1.442695
        %v767 = vpow.pop %v766
        %v768 = vsel %vm683, %v767, 0.0
        %769 = vadd.xlane.f32.xlu0 %v768
        %v770 = vpop.xlane.xlu0 %769
        %v771 = vrcp.pop %v770
        %v772 = vmul.f32 %v767, %v771
        %v774 = vsel %vm683, %v772, 0
        %776 = vmatprep.subr.mxu0 0.0
        %777 = vmatpush1.msra.mxu0 %v680
        %778 = vmatprep.subr.mxu0 0.0
        %779 = vmatpush1.msra.mxu0 0.0
        %780 = vmatprep.subr.mxu0 0.0
        %781 = vmatpush1.msra.mxu0 0.0
        %782 = vmatprep.subr.mxu0 0.0
        %783 = vmatpush1.msra.mxu0 0.0
        %784 = vmatprep.subr.mxu0 0.0
        %785 = vmatpush1.msra.mxu0 0.0
        %786 = vmatprep.subr.mxu0 0.0
        %787 = vmatpush1.msra.mxu0 0.0
        %788 = vmatprep.subr.mxu0 0.0
        %789 = vmatpush1.msra.mxu0 0.0
        %790 = vmatprep.subr.mxu0 0.0
        %791 = vmatpush1.msra.mxu0 0.0
        %792 = vmatprep.subr.mxu0 0.0
        %793 = vmatpush1.msra.mxu0 0.0
        %794 = vmatprep.subr.mxu0 0.0
        %795 = vmatpush1.msra.mxu0 0.0
        %796 = vmatprep.subr.mxu0 0.0
        %797 = vmatpush1.msra.mxu0 0.0
        %798 = vmatprep.subr.mxu0 0.0
        %799 = vmatpush1.msra.mxu0 0.0
        %800 = vmatprep.subr.mxu0 0.0
        %801 = vmatpush1.msra.mxu0 0.0
        %802 = vmatprep.subr.mxu0 0.0
        %803 = vmatpush1.msra.mxu0 0.0
        %804 = vmatprep.subr.mxu0 0.0
        %805 = vmatpush1.msra.mxu0 0.0
        %806 = vmatprep.subr.mxu0 0.0
        %807 = vmatpush1.msra.mxu0 0.0
        %808 = vmatprep.subr.mxu0 0.0
        %809 = vmatpush1.msra.mxu0 0.0
        %810 = vmatprep.subr.mxu0 0.0
        %811 = vmatpush1.msra.mxu0 0.0
        %812 = vmatprep.subr.mxu0 0.0
        %813 = vmatpush1.msra.mxu0 0.0
        %814 = vmatprep.subr.mxu0 0.0
        %815 = vmatpush1.msra.mxu0 0.0
        %816 = vmatprep.subr.mxu0 0.0
        %817 = vmatpush1.msra.mxu0 0.0
        %818 = vmatprep.subr.mxu0 0.0
        %819 = vmatpush1.msra.mxu0 0.0
        %820 = vmatprep.subr.mxu0 0.0
        %821 = vmatpush1.msra.mxu0 0.0
        %822 = vmatprep.subr.mxu0 0.0
        %823 = vmatpush1.msra.mxu0 0.0
        %824 = vmatprep.subr.mxu0 0.0
        %825 = vmatpush1.msra.mxu0 0.0
        %826 = vmatprep.subr.mxu0 0.0
        %827 = vmatpush1.msra.mxu0 0.0
        %828 = vmatprep.subr.mxu0 0.0
        %829 = vmatpush1.msra.mxu0 0.0
        %830 = vmatprep.subr.mxu0 0.0
        %831 = vmatpush1.msra.mxu0 0.0
        %832 = vmatprep.subr.mxu0 0.0
        %833 = vmatpush1.msra.mxu0 0.0
        %834 = vmatprep.subr.mxu0 0.0
        %835 = vmatpush1.msra.mxu0 0.0
        %836 = vmatprep.subr.mxu0 0.0
        %837 = vmatpush1.msra.mxu0 0.0
        %838 = vmatprep.subr.mxu0 0.0
        %839 = vmatpush1.msra.mxu0 0.0
        %840 = vmatprep.mubr.f32.mxu0 0.0
        %841 = vmatmul.mubr.f32.gmra.mrb[0].mxu0 %v774
        %v842 = vpop.f32.mrb[0].mxu0
        %v843 = vadd.f32 0.0, %v842
        %v844 = vpop.f32.mrb[0].mxu0
        %845 = vdwg.mxu0
        %v846 = vld [vmem:[%s414] sm:$0xff]
        %v848 = vsel %vm683, %v843, 0
        %850 = vmatprep.subr.mxu0 0.0
        %851 = vmatpush1.msra.mxu0 %v846
        %852 = vmatprep.subr.mxu0 0.0
        %853 = vmatpush1.msra.mxu0 0.0
        %854 = vmatprep.subr.mxu0 0.0
        %855 = vmatpush1.msra.mxu0 0.0
        %856 = vmatprep.subr.mxu0 0.0
        %857 = vmatpush1.msra.mxu0 0.0
        %858 = vmatprep.subr.mxu0 0.0
        %859 = vmatpush1.msra.mxu0 0.0
        %860 = vmatprep.subr.mxu0 0.0
        %861 = vmatpush1.msra.mxu0 0.0
        %862 = vmatprep.subr.mxu0 0.0
        %863 = vmatpush1.msra.mxu0 0.0
        %864 = vmatprep.subr.mxu0 0.0
        %865 = vmatpush1.msra.mxu0 0.0
        %866 = vmatprep.subr.mxu0 0.0
        %867 = vmatpush1.msra.mxu0 0.0
        %868 = vmatprep.subr.mxu0 0.0
        %869 = vmatpush1.msra.mxu0 0.0
        %870 = vmatprep.subr.mxu0 0.0
        %871 = vmatpush1.msra.mxu0 0.0
        %872 = vmatprep.subr.mxu0 0.0
        %873 = vmatpush1.msra.mxu0 0.0
        %874 = vmatprep.subr.mxu0 0.0
        %875 = vmatpush1.msra.mxu0 0.0
        %876 = vmatprep.subr.mxu0 0.0
        %877 = vmatpush1.msra.mxu0 0.0
        %878 = vmatprep.subr.mxu0 0.0
        %879 = vmatpush1.msra.mxu0 0.0
        %880 = vmatprep.subr.mxu0 0.0
        %881 = vmatpush1.msra.mxu0 0.0
        %882 = vmatprep.subr.mxu0 0.0
        %883 = vmatpush1.msra.mxu0 0.0
        %884 = vmatprep.subr.mxu0 0.0
        %885 = vmatpush1.msra.mxu0 0.0
        %886 = vmatprep.subr.mxu0 0.0
        %887 = vmatpush1.msra.mxu0 0.0
        %888 = vmatprep.subr.mxu0 0.0
        %889 = vmatpush1.msra.mxu0 0.0
        %890 = vmatprep.subr.mxu0 0.0
        %891 = vmatpush1.msra.mxu0 0.0
        %892 = vmatprep.subr.mxu0 0.0
        %893 = vmatpush1.msra.mxu0 0.0
        %894 = vmatprep.subr.mxu0 0.0
        %895 = vmatpush1.msra.mxu0 0.0
        %896 = vmatprep.subr.mxu0 0.0
        %897 = vmatpush1.msra.mxu0 0.0
        %898 = vmatprep.subr.mxu0 0.0
        %899 = vmatpush1.msra.mxu0 0.0
        %900 = vmatprep.subr.mxu0 0.0
        %901 = vmatpush1.msra.mxu0 0.0
        %902 = vmatprep.subr.mxu0 0.0
        %903 = vmatpush1.msra.mxu0 0.0
        %904 = vmatprep.subr.mxu0 0.0
        %905 = vmatpush1.msra.mxu0 0.0
        %906 = vmatprep.subr.mxu0 0.0
        %907 = vmatpush1.msra.mxu0 0.0
        %908 = vmatprep.subr.mxu0 0.0
        %909 = vmatpush1.msra.mxu0 0.0
        %910 = vmatprep.subr.mxu0 0.0
        %911 = vmatpush1.msra.mxu0 0.0
        %912 = vmatprep.subr.mxu0 0.0
        %913 = vmatpush1.msra.mxu0 0.0
        %914 = vmatprep.mubr.f32.mxu0 0.0
        %915 = vmatmul.mubr.f32.gmra.mrb[0].mxu0 %v848
        %v916 = vpop.f32.mrb[0].mxu0
        %v917 = vadd.f32 0.0, %v916
        %v918 = vpop.f32.mrb[0].mxu0
        %919 = vdwg.mxu0
        %p920 = scmp.eq.s32.totalorder %s27, 0
        // Predicated region
        $region53: #{multihead_attention_forward.1} parent=51 // pred_check
          %p921 = pneg %p920
        $region54: #{multihead_attention_forward.1} parent=51 // pred_check_branch
          %923 = sbr.rel (%p921) target = $region56
        $region55: #{multihead_attention_forward.1} parent=51 // pred_region
          %v924 = vld [vmem:[%s7] sm:$0x1]
          %v926 = vlaneseq
          %v927 = vshrl.u32 %v926, 7
          %v928 = vsub.s32 0, %v927
          %v929 = vrot.slane %v924, %v928
          %v931 = vadd.f32 %v917, %v929
          %932 = vst.msk [vmem:[#allocation2] sm:$0xff] %vm427, %v931
        $region56: #{multihead_attention_forward.1} parent=51 // pred_fallthru
          _
        %p933 = scmp.gt.s32.totalorder %s27, 0
        // Predicated region
        $region57: #{multihead_attention_forward.1} parent=51 // pred_check
          %p934 = pneg %p933
        $region58: #{multihead_attention_forward.1} parent=51 // pred_check_branch
          %936 = sbr.rel (%p934) target = $region60
        $region59: #{multihead_attention_forward.1} parent=51 // pred_region
          %v937 = vld [vmem:[#allocation2] sm:$0xff]
          %v938 = vadd.f32 %v937, %v917
          %939 = vst.msk [vmem:[#allocation2] sm:$0xff] %vm427, %v938
        $region60: #{multihead_attention_forward.1} parent=51 // pred_fallthru
          _
        %p940 = scmp.eq.s32.totalorder %s27, 3
        // Predicated region
        $region61: #{multihead_attention_forward.1} parent=51 // pred_check
          %p941 = pneg %p940
        $region62: #{multihead_attention_forward.1} parent=51 // pred_check_branch
          %943 = sbr.rel (%p941) target = $region64
        $region63: #{multihead_attention_forward.1} parent=51 // pred_region
          %v944 = vld [vmem:[#allocation2] sm:$0xff]
          %945 = vst.msk [vmem:[%s386] sm:$0xff] %vm427, %v944
        $region64: #{multihead_attention_forward.1} parent=51 // pred_fallthru
          _
        %s946 = sand.u32 %s245, 1
        %s947 = scalar_lea.sflag [#allocation4], %s946
        %s948 = sand.u32 %s245, 1
        %s949 = smul.addr %s948, 8
        %s950 = scalar_lea.vmem [#allocation3], %s949
        // Predicated region
        $region65: #{multihead_attention_forward.1} parent=51 // pred_check
          %p951 = pneg %p255
        $region66: #{multihead_attention_forward.1} parent=51 // pred_check_branch
          %953 = sbr.rel (%p951) target = $region68
        $region67: #{multihead_attention_forward.1} parent=51 // pred_region
          %s955 = ssub.s32 128, 128
          %956 = vsyncadd %s947, %s955
          %s957 = smul.addr %s26, 128
          %s958 = scalar_lea.hbm %s8, %s957
          %s960 = sshll.u32 %s950, 4
          %s961 = int_to_ptr.vmem [resolvable:$true] %s960
          %963 = dma.vmem_to_hbm [thread:$0]  %s961, 128, %s958, %s947
        $region68: #{multihead_attention_forward.1} parent=51 // pred_fallthru
          _
      $region52: #{multihead_attention_forward.1} parent=5 // pred_fallthru
        _
      %p964 = scmp.le.s32.totalorder 2, %s17
      // Predicated region
      $region69: #{multihead_attention_forward.1} parent=5 // pred_check
        %p965 = pneg %p964
      $region70: #{multihead_attention_forward.1} parent=5 // pred_check_branch
        %967 = sbr.rel (%p965) target = $region72
      $region71: #{multihead_attention_forward.1} parent=5 // pred_region
        %s968 = ssub.s32 %s17, 2
        // Predicated region
        $region73: #{multihead_attention_forward.1} parent=71 // pred_check
          %p969 = pneg %p261
        $region74: #{multihead_attention_forward.1} parent=71 // pred_check_branch
          %971 = sbr.rel (%p969) target = $region76
        $region75: #{multihead_attention_forward.1} parent=71 // pred_region
          %s972 = sand.u32 %s246, 1
          %s973 = scalar_lea.sflag [#allocation4], %s972
          %s974 = sand.u32 %s246, 1
          %s975 = smul.addr %s974, 8
          %s976 = scalar_lea.vmem [#allocation3], %s975
          %977 = dma.done %s973, 128
        $region76: #{multihead_attention_forward.1} parent=71 // pred_fallthru
          _
      $region72: #{multihead_attention_forward.1} parent=5 // pred_fallthru
        _
    $region6: #{multihead_attention_forward.1} parent=1 // loop_footer
      %s21 = sadd.s32 1, %s17
    $region7: #{multihead_attention_forward.1} parent=1 // loop_footer_branch
      %16 = sbr.rel target = $region3
    $region8: #{multihead_attention_forward.1} parent=1 // loop_exit
      _
    %978 = vsyncpa [#allocation4], 1
    %s979 = scalar_lea.sflag [#allocation4], 1
    %980 = vsyncpa %s979, 1

</llo_original>
